<compile_context>
chip_gen: v5e
topology: v5e:2x2
jax: 0.10.0
libtpu: 0.0.40
codegen_flags: <defaults>
</compile_context>

<pallas_src>
import jax
import jax.numpy as jnp
from jax.experimental import pallas as pl
from jax.experimental.pallas import tpu as pltpu


def _round_up(x, n):
    return ((x + n - 1) // n) * n


def _linear_kernel(x_ref, w_ref, b_ref, o_ref):
    """One M-tile of logits^T = W @ x_tile^T + b.

    x_ref: (TM, H)   activation tile (streamed, double-buffered)
    w_ref: (O, H)    weight in native nn.Linear layout (VMEM-resident)
    b_ref: (O, 1)    bias (VMEM-resident)
    o_ref: (O, TM)   transposed logits tile -> lane-dense stores (TM >= 128)
    """
    acc = jax.lax.dot_general(
        w_ref[...], x_ref[...],
        dimension_numbers=(((1,), (1,)), ((), ())),   # contract hidden dims
        preferred_element_type=jnp.float32,
    )                                                  # (O, TM), f32 accumulation
    acc = acc + b_ref[...].astype(jnp.float32)         # lane-broadcast bias add
    o_ref[...] = acc.astype(o_ref.dtype)


@jax.jit
def output_forward(x, weight, bias):
    """Pallas TPU equivalent of Output.forward: x @ weight.T + bias.

    x: (..., hidden);  weight: (output_size, hidden);  bias: (output_size,)
    Returns (..., output_size).
    """
    hidden = x.shape[-1]
    output_size = weight.shape[0]
    lead_shape = x.shape[:-1]
    m = 1
    for d in lead_shape:
        m *= d

    # --- Static tile-size selection ----------------------------------------
    itemsize = jnp.dtype(x.dtype).itemsize
    bytes_per_row = hidden * itemsize
    # Target ~1 MiB activation tiles; TM a multiple of 128 (covers the f32/bf16
    # sublane constraints and keeps the transposed output tile lane-dense).
    tm = (1 << 20) // max(bytes_per_row, 1)
    tm = max(128, min(4096, tm))
    tm = (tm // 128) * 128
    m128 = _round_up(m, 128)
    # Bound padding waste to roughly <= 1/8 of m in the multi-tile case.
    tm = min(tm, max(128, _round_up(max(m128 // 8, 1), 128)))
    if tm >= m128:            # single tile: block == full (padded) array
        tm = m128
    m_pad = _round_up(m, tm)
    grid = (m_pad // tm,)

    # --- Operand prep -------------------------------------------------------
    x2d = x.reshape(m, hidden)
    if m_pad != m:
        x2d = jnp.pad(x2d, ((0, m_pad - m), (0, 0)))
    b2d = bias.reshape(output_size, 1)

    cost = pl.CostEstimate(
        flops=2 * m_pad * hidden * output_size,
        transcendentals=0,
        bytes_accessed=(m_pad * hidden + output_size * hidden
                        + output_size + m_pad * output_size) * itemsize,
    )

    out_t = pl.pallas_call(
        _linear_kernel,
        out_shape=jax.ShapeDtypeStruct((output_size, m_pad), x.dtype),
        grid_spec=pltpu.PrefetchScalarGridSpec(
            num_scalar_prefetch=0,
            grid=grid,
            in_specs=[
                pl.BlockSpec((tm, hidden), lambda i: (i, 0)),           # streamed
                pl.BlockSpec((output_size, hidden), lambda i: (0, 0)),  # resident
                pl.BlockSpec((output_size, 1), lambda i: (0, 0)),       # resident
            ],
            out_specs=pl.BlockSpec((output_size, tm), lambda i: (0, i)),
        ),
        compiler_params=pltpu.CompilerParams(
            # Independent M tiles: shard across v7x's two TensorCores.
            dimension_semantics=("parallel",)),
        cost_estimate=cost,
    )(x2d, weight, b2d)

    # (O, m_pad) -> (m, O); transpose/slice of the tiny logits array fuses in XLA.
    logits = out_t[:, :m].T
    return logits.reshape(*lead_shape, output_size)


if __name__ == "__main__":
    # Small shapes consistent with the module: batch=2, seq=8, hidden=32, output_size=4
    batch, seq, hidden, output_size = 2, 8, 32, 4

    key = jax.random.PRNGKey(0)
    kx, kw, kb = jax.random.split(key, 3)

    x = jax.random.normal(kx, (batch, seq, hidden), dtype=jnp.float32)
    # nn.Linear parameter shapes: W (out, in), b (out,)
    weight = jax.random.normal(kw, (output_size, hidden), dtype=jnp.float32) * 0.1
    bias = jax.random.normal(kb, (output_size,), dtype=jnp.float32) * 0.1

    logits = output_forward(x, weight, bias)
    logits = jax.block_until_ready(logits)

    # Reference check against plain JAX (same math as torch nn.Linear).
    ref = x @ weight.T + bias
    assert logits.shape == (batch, seq, output_size)
    assert jnp.allclose(logits, ref, atol=1e-5, rtol=1e-5)

    print("KERNEL_OK")
</pallas_src>

<mosaic_0001>
module attributes {stable_mosaic.version = 11 : i64} {
  func.func @_linear_kernel(%arg0: i32, %arg1: memref<128x32xf32, #tpu.memory_space<vmem>>, %arg2: memref<4x32xf32, #tpu.memory_space<vmem>>, %arg3: memref<4x1xf32, #tpu.memory_space<vmem>>, %arg4: memref<4x128xf32, #tpu.memory_space<vmem>>) attributes {dimension_semantics = [#tpu.dimension_semantics<parallel>], iteration_bounds = array<i64: 1>, scalar_prefetch = 0 : i64, scratch_operands = 0 : i64, tpu.core_type = #tpu.core_type<tc>, window_params = [{transform_indices = @transform_0, window_bounds = array<i64: 128, 32>}, {pipeline_mode = #tpu.pipeline_mode<synchronous>, transform_indices = @transform_1, window_bounds = array<i64: 4, 32>}, {pipeline_mode = #tpu.pipeline_mode<synchronous>, transform_indices = @transform_2, window_bounds = array<i64: 4, 1>}, {transform_indices = @transform_3, window_bounds = array<i64: 4, 128>}]} {
    %c0 = arith.constant 0 : index
    %c0_0 = arith.constant 0 : index
    %0 = vector.load %arg2[%c0, %c0_0] : memref<4x32xf32, #tpu.memory_space<vmem>>, vector<4x32xf32>
    %c0_1 = arith.constant 0 : index
    %c0_2 = arith.constant 0 : index
    %1 = vector.load %arg1[%c0_1, %c0_2] : memref<128x32xf32, #tpu.memory_space<vmem>>, vector<128x32xf32>
    %cst = arith.constant dense<0.000000e+00> : vector<4x128xf32>
    %2 = tpu.matmul %0, %1, %cst {dimension_numbers = #tpu.dot_dimension_numbers<[1], [1], [0], [0], [0, 0, 1, 0], [], []>} : vector<4x32xf32>, vector<128x32xf32>, vector<4x128xf32> -> vector<4x128xf32>
    %c0_3 = arith.constant 0 : index
    %c0_4 = arith.constant 0 : index
    %3 = vector.load %arg3[%c0_3, %c0_4] : memref<4x1xf32, #tpu.memory_space<vmem>>, vector<4x1xf32>
    %4 = vector.broadcast %3 : vector<4x1xf32> to vector<4x128xf32>
    %5 = arith.addf %2, %4 : vector<4x128xf32>
    %c0_5 = arith.constant 0 : index
    %c0_6 = arith.constant 0 : index
    %6 = vector.load %arg4[%c0_5, %c0_6] : memref<4x128xf32, #tpu.memory_space<vmem>>, vector<4x128xf32>
    tpu.vector_store %arg4[%c0_5, %c0_6], %5 {strides = array<i32>} : memref<4x128xf32, #tpu.memory_space<vmem>>, vector<4x128xf32>,
    return
  }
  func.func @transform_0(%arg0: i32) -> (i32, i32) {
    %c0_i32 = arith.constant 0 : i32
    %c0_i32_0 = arith.constant 0 : i32
    return %arg0, %c0_i32 : i32, i32
  }
  func.func @transform_1(%arg0: i32) -> (i32, i32) {
    %c0_i32 = arith.constant 0 : i32
    %c0_i32_0 = arith.constant 0 : i32
    %c0_i32_1 = arith.constant 0 : i32
    return %c0_i32, %c0_i32_0 : i32, i32
  }
  func.func @transform_2(%arg0: i32) -> (i32, i32) {
    %c0_i32 = arith.constant 0 : i32
    %c0_i32_0 = arith.constant 0 : i32
    %c0_i32_1 = arith.constant 0 : i32
    return %c0_i32, %c0_i32_0 : i32, i32
  }
  func.func @transform_3(%arg0: i32) -> (i32, i32) {
    %c0_i32 = arith.constant 0 : i32
    %c0_i32_0 = arith.constant 0 : i32
    return %c0_i32, %arg0 : i32, i32
  }
}

</mosaic_0001>

<llo_original>
// kernel: output_forward.1
$region0: #{output_forward.1}
  #allocation0 [shape = 'u32[]', space=smem, size = 0x4, offset = 0x4, fixed_abs, tag = 'smem constant byte address 0x4 - core index']
  #allocation1 [shape = 'u32[72,128]{1,0:T(1,128)}', space=vmem, size = 0x9000, scoped, tag = 'internal scratch']
  %s0 = inlined_call_operand.vmem [shape: f32[128,32], index: 0, kind: input, shape index: {}]
  %s1 = inlined_call_operand.vmem [shape: f32[4,32], index: 1, kind: input, shape index: {}]
  %s2 = inlined_call_operand.vmem [shape: f32[4,1], index: 2, kind: input, shape index: {}]
  %s3 = inlined_call_operand.vmem [shape: f32[4,128], index: 3, kind: output, shape index: {}]
  %s4 = sld [smem:[#allocation0]]
  $region22: #{output_forward.1} parent=0
    _
  %s6 = ssub.s32 1, %s4
  %s7 = scalar_select 0, %s6, %s4
  // Predicated region
  $region2: #{output_forward.1} parent=0 // pred_check
    _
  $region3: #{output_forward.1} parent=0 // pred_check_branch
    %9 = sbr.rel (0) target = $region5
  $region4: #{output_forward.1} parent=0 // pred_region
    _
  $region5: #{output_forward.1} parent=0 // pred_fallthru
    _
  // Predicated region
  $region6: #{output_forward.1} parent=0 // pred_check
    _
  $region7: #{output_forward.1} parent=0 // pred_check_branch
    %11 = sbr.rel (0) target = $region9
  $region8: #{output_forward.1} parent=0 // pred_region
    _
  $region9: #{output_forward.1} parent=0 // pred_fallthru
    _
  // Predicated region
  $region10: #{output_forward.1} parent=0 // pred_check
    _
  $region11: #{output_forward.1} parent=0 // pred_check_branch
    %13 = sbr.rel (0) target = $region13
  $region12: #{output_forward.1} parent=0 // pred_region
    _
  $region13: #{output_forward.1} parent=0 // pred_fallthru
    _
  %v14 = vld [vmem:[%s1] sm:$0xf]
  %v15 = vld [vmem:[%s0] sm:$0xff]
  %v16 = vld [vmem:[%s0 + $0x8] sm:$0xff]
  %v17 = vld [vmem:[%s0 + $0x10] sm:$0xff]
  %v18 = vld [vmem:[%s0 + $0x18] sm:$0xff]
  %v19 = vld [vmem:[%s0 + $0x20] sm:$0xff]
  %v20 = vld [vmem:[%s0 + $0x28] sm:$0xff]
  %v21 = vld [vmem:[%s0 + $0x30] sm:$0xff]
  %v22 = vld [vmem:[%s0 + $0x38] sm:$0xff]
  %v23 = vld [vmem:[%s0 + $0x40] sm:$0xff]
  %v24 = vld [vmem:[%s0 + $0x48] sm:$0xff]
  %v25 = vld [vmem:[%s0 + $0x50] sm:$0xff]
  %v26 = vld [vmem:[%s0 + $0x58] sm:$0xff]
  %v27 = vld [vmem:[%s0 + $0x60] sm:$0xff]
  %v28 = vld [vmem:[%s0 + $0x68] sm:$0xff]
  %v29 = vld [vmem:[%s0 + $0x70] sm:$0xff]
  %v30 = vld [vmem:[%s0 + $0x78] sm:$0xff]
  %v31 = vld [vmem:[%s2] sm:$0xf]
  %33 = vset.pattern.permute.xlu0 0
  %34 = vperm.xlu0 %33, %v31
  %v35 = vpop.permute.xlu0 %34
  %vm37 = vcmask 261120
  %v39 = vsel %vm37, %v14, 0
  %v42 = vsel %vm37, %v15, 0
  %v45 = vsel %vm37, %v16, 0
  %v48 = vsel %vm37, %v17, 0
  %v51 = vsel %vm37, %v18, 0
  %v54 = vsel %vm37, %v19, 0
  %v57 = vsel %vm37, %v20, 0
  %v60 = vsel %vm37, %v21, 0
  %v63 = vsel %vm37, %v22, 0
  %v66 = vsel %vm37, %v23, 0
  %v69 = vsel %vm37, %v24, 0
  %v72 = vsel %vm37, %v25, 0
  %v75 = vsel %vm37, %v26, 0
  %v78 = vsel %vm37, %v27, 0
  %v81 = vsel %vm37, %v28, 0
  %v84 = vsel %vm37, %v29, 0
  %v87 = vsel %vm37, %v30, 0
  %89 = vmatpush.xpose.msra.mxu0 %v87
  %90 = vmatpush.xpose.msra.mxu0 %v84
  %91 = vmatpush.xpose.msra.mxu0 %v81
  %92 = vmatpush.xpose.msra.mxu0 %v78
  %93 = vmatpush.xpose.msra.mxu0 %v75
  %94 = vmatpush.xpose.msra.mxu0 %v72
  %95 = vmatpush.xpose.msra.mxu0 %v69
  %96 = vmatpush.xpose.msra.mxu0 %v66
  %97 = vmatpush.xpose.msra.mxu0 %v63
  %98 = vmatpush.xpose.msra.mxu0 %v60
  %99 = vmatpush.xpose.msra.mxu0 %v57
  %100 = vmatpush.xpose.msra.mxu0 %v54
  %101 = vmatpush.xpose.msra.mxu0 %v51
  %102 = vmatpush.xpose.msra.mxu0 %v48
  %103 = vmatpush.xpose.msra.mxu0 %v45
  %104 = vmatpush.xpose.msra.mxu0 %v42
  %105 = vmatmul.f32.gmra.mxu0 %v39
  %v106 = vpop.f32.mrf.mxu0
  %v107 = vadd.f32 %v35, %v106
  %108 = vdwg.mxu0
  %109 = vst [vmem:[%s3] sm:$0xf] %v107
  // Predicated region
  $region14: #{output_forward.1} parent=0 // pred_check
    _
  $region15: #{output_forward.1} parent=0 // pred_check_branch
    %111 = sbr.rel (0) target = $region17
  $region16: #{output_forward.1} parent=0 // pred_region
    _
  $region17: #{output_forward.1} parent=0 // pred_fallthru
    _
  // Predicated region
  $region18: #{output_forward.1} parent=0 // pred_check
    _
  $region19: #{output_forward.1} parent=0 // pred_check_branch
    %113 = sbr.rel (0) target = $region21
  $region20: #{output_forward.1} parent=0 // pred_region
    _
  $region21: #{output_forward.1} parent=0 // pred_fallthru
    _

</llo_original>
